<compile_context>
chip_gen: v5e
topology: v5e:2x2
jax: 0.10.0
libtpu: 0.0.40
codegen_flags: <defaults>
</compile_context>

<pallas_src>
import jax
import jax.numpy as jnp
from jax.experimental import pallas as pl
from jax.experimental.pallas import tpu as pltpu


def _upsample_nearest_kernel(x_ref, r_ref, o_ref):
    # x_ref: (1, Cb, H, W)      input channel block (native dtype)
    # r_ref: (W, S*OW)          one-hot lane-replication matrix (compute dtype)
    # o_ref: (1, Cb, H, S*OW)   output block; lane dim packs the S H-copies so a
    #                           free wrapper reshape yields (OH, OW).
    _, cb, h, w = x_ref.shape
    x = x_ref[...].reshape(cb * h, w).astype(r_ref.dtype)   # free when H % 8 == 0
    out = jnp.dot(x, r_ref[...], preferred_element_type=jnp.float32)  # (Cb*H, S*OW)
    o_ref[...] = out.reshape(o_ref.shape).astype(o_ref.dtype)


def _largest_divisor_leq(n, cap):
    cap = int(max(1, min(n, cap)))
    for d in range(cap, 0, -1):
        if n % d == 0:
            return d
    return 1


def upsample_nearest(x, scale_factor=2):
    """Equivalent of Upsample(scale_factor=s, mode='nearest')(x) for NCHW x."""
    n, c, h, w = x.shape
    s = int(round(float(scale_factor)))
    if s < 1 or float(s) != float(scale_factor):
        raise NotImplementedError("Only integer scale_factor nearest upsampling is implemented.")
    oh, ow = h * s, w * s
    lane_out = s * ow

    compute_dtype = x.dtype if jnp.issubdtype(x.dtype, jnp.floating) else jnp.float32
    # TODO(synk): integer inputs wider than 24 bits lose precision through the
    # f32 matmul path (float feature maps -- the NexToU case -- are exact).

    # One-hot replication matrix, already packed for the H-axis duplication:
    #   R[w_in, dh*OW + ow] = 1  iff  w_in == (ow * W) // OW   (== ow // s)
    src_w = (jnp.arange(ow) * w) // ow                          # (OW,)
    r_once = jnp.arange(w)[:, None] == src_w[None, :]           # (W, OW) one-hot
    r = jnp.tile(r_once, (1, s)).astype(compute_dtype)          # (W, S*OW)

    # --- channel blocking: amortize grid-step overhead, keep VMEM bounded ----
    itemsize = jnp.dtype(x.dtype).itemsize
    r_bytes = w * lane_out * jnp.dtype(compute_dtype).itemsize
    bytes_per_channel = 2 * (h * w + oh * ow) * itemsize        # double-buffered in+out
    vmem_budget = 24 * 1024 * 1024                              # safe on v5e/v6e/v7x
    cb_cap = max(1, (vmem_budget - 2 * r_bytes) // max(bytes_per_channel, 1))
    cb = _largest_divisor_leq(c, cb_cap)
    # Keep >= 2 grid steps when possible so both v7x TensorCores get work.
    if n * (c // cb) < 2 and c > 1:
        cb = _largest_divisor_leq(c, c // 2)
    grid = (n, c // cb)

    est_vmem = 2 * cb * (h * w + oh * ow) * itemsize + 2 * r_bytes + (2 << 20)
    vmem_limit = int(min(max(est_vmem, 32 * 1024 * 1024), 64 * 1024 * 1024))

    out_bytes = n * c * oh * ow * itemsize
    in_bytes = n * c * h * w * itemsize + r_bytes
    cost = pl.CostEstimate(
        flops=2 * n * c * h * w * lane_out,   # one-hot matmul; op is memory-bound
        transcendentals=0,
        bytes_accessed=in_bytes + out_bytes,
    )

    packed = pl.pallas_call(
        _upsample_nearest_kernel,
        out_shape=jax.ShapeDtypeStruct((n, c, h, lane_out), x.dtype),
        grid=grid,
        in_specs=[
            pl.BlockSpec((1, cb, h, w), lambda i, j: (i, j, 0, 0)),
            pl.BlockSpec((w, lane_out), lambda i, j: (0, 0)),
        ],
        out_specs=pl.BlockSpec((1, cb, h, lane_out), lambda i, j: (i, j, 0, 0)),
        compiler_params=pltpu.CompilerParams(
            dimension_semantics=("parallel", "parallel"),
            vmem_limit_bytes=vmem_limit,
        ),
        cost_estimate=cost,
    )(x, r)

    # (N, C, H, S*OW) and (N, C, OH, OW) share the same row-major linear order,
    # so this reshape is layout-free (bitcast) at the XLA level.
    return packed.reshape(n, c, oh, ow)


if __name__ == "__main__":
    key = jax.random.PRNGKey(0)
    # Small NCHW input consistent with the module's forward (conv feature map).
    x = jax.random.normal(key, (2, 4, 16, 16), dtype=jnp.float32)

    y = upsample_nearest(x, scale_factor=2)
    y = jax.block_until_ready(y)

    # Reference: integer-scale PyTorch 'nearest' == repeat along H and W.
    ref = jnp.repeat(jnp.repeat(x, 2, axis=2), 2, axis=3)
    assert y.shape == (2, 4, 32, 32), y.shape
    assert y.dtype == x.dtype
    assert jnp.array_equal(y, ref), float(jnp.max(jnp.abs(y - ref)))

    # bf16 path + scale_factor=3 (exercises channel blocking and bf16 matmul).
    xb = jax.random.normal(jax.random.PRNGKey(1), (1, 6, 8, 8), dtype=jnp.bfloat16)
    yb = jax.block_until_ready(upsample_nearest(xb, scale_factor=3))
    refb = jnp.repeat(jnp.repeat(xb, 3, axis=2), 3, axis=3)
    assert yb.shape == (1, 6, 24, 24) and yb.dtype == xb.dtype
    assert jnp.array_equal(yb, refb)

    print("KERNEL_OK")
</pallas_src>

<mosaic_0001>
module attributes {stable_mosaic.version = 11 : i64} {
  func.func @_upsample_nearest_kernel(%arg0: i32, %arg1: i32, %arg2: memref<1x4x16x16xf32, #tpu.memory_space<vmem>>, %arg3: memref<16x64xf32, #tpu.memory_space<vmem>>, %arg4: memref<1x4x16x64xf32, #tpu.memory_space<vmem>>) attributes {dimension_semantics = [#tpu.dimension_semantics<parallel>, #tpu.dimension_semantics<parallel>], iteration_bounds = array<i64: 2, 1>, scalar_prefetch = 0 : i64, scratch_operands = 0 : i64, tpu.core_type = #tpu.core_type<tc>, window_params = [{transform_indices = @transform_0, window_bounds = array<i64: 1, 4, 16, 16>}, {pipeline_mode = #tpu.pipeline_mode<synchronous>, transform_indices = @transform_1, window_bounds = array<i64: 16, 64>}, {transform_indices = @transform_2, window_bounds = array<i64: 1, 4, 16, 64>}]} {
    %c0 = arith.constant 0 : index
    %c0_0 = arith.constant 0 : index
    %c0_1 = arith.constant 0 : index
    %c0_2 = arith.constant 0 : index
    %0 = vector.load %arg2[%c0, %c0_0, %c0_1, %c0_2] : memref<1x4x16x16xf32, #tpu.memory_space<vmem>>, vector<1x4x16x16xf32>
    %1 = vector.shape_cast %0 : vector<1x4x16x16xf32> to vector<64x16xf32>
    %c0_3 = arith.constant 0 : index
    %c0_4 = arith.constant 0 : index
    %2 = vector.load %arg3[%c0_3, %c0_4] : memref<16x64xf32, #tpu.memory_space<vmem>>, vector<16x64xf32>
    %cst = arith.constant dense<0.000000e+00> : vector<64x64xf32>
    %3 = tpu.matmul %1, %2, %cst {dimension_numbers = #tpu.dot_dimension_numbers<[1], [0], [0], [1], [0, 0, 1, 1], [], []>} : vector<64x16xf32>, vector<16x64xf32>, vector<64x64xf32> -> vector<64x64xf32>
    %4 = vector.shape_cast %3 : vector<64x64xf32> to vector<1x4x16x64xf32>
    %c0_5 = arith.constant 0 : index
    %c0_6 = arith.constant 0 : index
    %c0_7 = arith.constant 0 : index
    %c0_8 = arith.constant 0 : index
    %5 = vector.load %arg4[%c0_5, %c0_6, %c0_7, %c0_8] : memref<1x4x16x64xf32, #tpu.memory_space<vmem>>, vector<1x4x16x64xf32>
    tpu.vector_store %arg4[%c0_5, %c0_6, %c0_7, %c0_8], %4 {strides = array<i32>} : memref<1x4x16x64xf32, #tpu.memory_space<vmem>>, vector<1x4x16x64xf32>,
    return
  }
  func.func @transform_0(%arg0: i32, %arg1: i32) -> (i32, i32, i32, i32) {
    %c0_i32 = arith.constant 0 : i32
    %c0_i32_0 = arith.constant 0 : i32
    %c0_i32_1 = arith.constant 0 : i32
    return %arg0, %arg1, %c0_i32, %c0_i32_0 : i32, i32, i32, i32
  }
  func.func @transform_1(%arg0: i32, %arg1: i32) -> (i32, i32) {
    %c0_i32 = arith.constant 0 : i32
    %c0_i32_0 = arith.constant 0 : i32
    %c0_i32_1 = arith.constant 0 : i32
    return %c0_i32, %c0_i32_0 : i32, i32
  }
  func.func @transform_2(%arg0: i32, %arg1: i32) -> (i32, i32, i32, i32) {
    %c0_i32 = arith.constant 0 : i32
    %c0_i32_0 = arith.constant 0 : i32
    %c0_i32_1 = arith.constant 0 : i32
    return %arg0, %arg1, %c0_i32, %c0_i32_0 : i32, i32, i32, i32
  }
}

</mosaic_0001>

<llo_original>
// kernel: tpu_custom_call.1
$region0: #{tpu_custom_call.1}
  #allocation0 [shape = 'u32[]', space=smem, size = 0x4, offset = 0x4, fixed_abs, tag = 'smem constant byte address 0x4 - core index']
  #allocation1 [shape = 'u32[72,128]{1,0:T(1,128)}', space=vmem, size = 0x9000, scoped, tag = 'internal scratch']
  %s0 = inlined_call_operand.hbm [shape: f32[2,4,16,16], index: 0, kind: input, shape index: {}]
  %s1 = inlined_call_operand.hbm [shape: f32[16,64], index: 1, kind: input, shape index: {}]
  %s2 = inlined_call_operand.hbm [shape: f32[2,4,16,64], index: 2, kind: output, shape index: {}]
  %s3 = sld [smem:[#allocation0]]
  $region49: #{tpu_custom_call.1} parent=0
    _
  %s5 = ssub.s32 1, %s3
  %s6 = scalar_select 0, %s5, %s3
  $region1: #{tpu_custom_call.1} parent=0
    #allocation2 [shape = 'u8[65536]{0}', space=vmem, size = 0x10000, scoped, tag = 'input window, operand 0']
    #allocation3 [shape = 's32[2]{0}', space=sflag, size = 0x8, scoped, tag = 'scoped memory for tpu_custom_call.1']
    #allocation4 [shape = 's32[2]{0}', space=sflag, size = 0x8, scoped, tag = 'scoped memory for tpu_custom_call.1']
    #allocation5 [shape = 'u8[8192]{0}', space=vmem, size = 0x2000, scoped, tag = 'input window, operand 1, single buffered']
    #allocation6 [shape = 's32[1]{0}', space=sflag, size = 0x4, scoped, tag = 'scoped memory for tpu_custom_call.1']
    #allocation7 [shape = 'u8[65536]{0}', space=vmem, size = 0x10000, scoped, tag = 'output window, operand 0']
    %7 = vsyncpa [#allocation3], 0
    %s8 = scalar_lea.sflag [#allocation3], 1
    %9 = vsyncpa %s8, 0
    %10 = vsyncpa [#allocation6], 0
    %11 = vsyncpa [#allocation4], 0
    %s12 = scalar_lea.sflag [#allocation4], 1
    %13 = vsyncpa %s12, 0
    loop: start=0, step=1, limit=4
    $region2: #{tpu_custom_call.1} parent=1 // loop_pre_header
      _
    $region3: #{tpu_custom_call.1} parent=1 // loop_header
      %s15 = sphi 0, %s19
      %p16 = scmp.ge.s32.totalorder %s15, 4
      %s22 = sphi 0, %s34
      %s23 = sphi 0, %s30
      %s24 = sphi 0, %s22
      %s25 = sphi 0, %s23
      %s26 = sphi 0, %s24
      %s27 = sphi 0, %s25
      %s39 = sphi 0, %s41
      %s42 = sphi 0, %s39
      %s43 = sphi 0, %s42
      %s59 = sphi 0, %s43
      %s63 = sphi 0, %s63
      %s65 = sphi 0, %s63
      %s66 = sphi 0, %s65
      %s80 = sphi 0, %s66
      %s88 = sphi 0, %s90
      %s91 = sphi 0, %s88
      %s92 = sphi 0, %s91
      %s108 = sphi 0, %s92
    $region4: #{tpu_custom_call.1} parent=1 // loop_header_branch
      %18 = sbr.rel (%p16) target = $region8
    $region5: #{tpu_custom_call.1} parent=1 // loop_body
      %s20 = ssub.s32 %s15, 1
      %s21 = ssub.s32 %s15, 2
      %s28 = sadd.s32 1, %s23
      %p29 = scmp.ge.s32.totalorder %s28, 1
      %s30 = scalar_select %p29, 0, %s28
      %s31 = sadd.s32 1, %s22
      %s32 = scalar_select %p29, %s31, %s22
      %p33 = scmp.ge.s32.totalorder %s32, 2
      %s34 = scalar_select %p33, 0, %s32
      %s35 = ssub.s32 %s22, %s34
      %s36 = ssub.s32 %s23, %s30
      %s37 = sor.u32 %s35, %s36
      %p38 = scmp.eq.s32.totalorder %s37, 0
      %s40 = sadd.s32 %s39, 1
      %s41 = scalar_select %p38, %s39, %s40
      %p44 = pneg %p38
      %p45 = scmp.eq.s32.totalorder %s15, 1
      %p46 = por %p44, %p45
      %p47 = scmp.ne.s32.totalorder %s39, %s42
      %p48 = scmp.eq.s32.totalorder %s15, 0
      %p49 = por %p47, %p48
      %p50 = scmp.ne.s32.totalorder %s39, %s42
      %p51 = scmp.eq.s32.totalorder %s20, 1
      %p52 = por %p50, %p51
      %p53 = scmp.ne.s32.totalorder %s42, %s43
      %p54 = scmp.eq.s32.totalorder %s20, 0
      %p55 = por %p53, %p54
      %p56 = scmp.ne.s32.totalorder %s42, %s43
      %p57 = scmp.eq.s32.totalorder %s21, 1
      %p58 = por %p56, %p57
      %p60 = scmp.ne.s32.totalorder %s43, %s59
      %p61 = scmp.eq.s32.totalorder %s21, 0
      %p62 = por %p60, %p61
      %s64 = sadd.s32 %s63, 1
      %p67 = scmp.eq.s32.totalorder %s15, 1
      %p68 = scmp.ne.s32.totalorder %s63, %s65
      %p69 = scmp.eq.s32.totalorder %s15, 0
      %p70 = por %p68, %p69
      %p71 = scmp.ne.s32.totalorder %s63, %s65
      %p72 = scmp.eq.s32.totalorder %s20, 1
      %p73 = por %p71, %p72
      %p74 = scmp.ne.s32.totalorder %s65, %s66
      %p75 = scmp.eq.s32.totalorder %s20, 0
      %p76 = por %p74, %p75
      %p77 = scmp.ne.s32.totalorder %s65, %s66
      %p78 = scmp.eq.s32.totalorder %s21, 1
      %p79 = por %p77, %p78
      %p81 = scmp.ne.s32.totalorder %s66, %s80
      %p82 = scmp.eq.s32.totalorder %s21, 0
      %p83 = por %p81, %p82
      %s84 = ssub.s32 %s22, %s34
      %s85 = ssub.s32 %s23, %s30
      %s86 = sor.u32 %s84, %s85
      %p87 = scmp.eq.s32.totalorder %s86, 0
      %s89 = sadd.s32 %s88, 1
      %s90 = scalar_select %p87, %s88, %s89
      %p93 = pneg %p87
      %p94 = scmp.eq.s32.totalorder %s15, 1
      %p95 = por %p93, %p94
      %p96 = scmp.ne.s32.totalorder %s88, %s91
      %p97 = scmp.eq.s32.totalorder %s15, 0
      %p98 = por %p96, %p97
      %p99 = scmp.ne.s32.totalorder %s88, %s91
      %p100 = scmp.eq.s32.totalorder %s20, 1
      %p101 = por %p99, %p100
      %p102 = scmp.ne.s32.totalorder %s91, %s92
      %p103 = scmp.eq.s32.totalorder %s20, 0
      %p104 = por %p102, %p103
      %p105 = scmp.ne.s32.totalorder %s91, %s92
      %p106 = scmp.eq.s32.totalorder %s21, 1
      %p107 = por %p105, %p106
      %p109 = scmp.ne.s32.totalorder %s92, %s108
      %p110 = scmp.eq.s32.totalorder %s21, 0
      %p111 = por %p109, %p110
      %p112 = scmp.le.s32.totalorder 1, %s15
      %p113 = scmp.lt.s32.totalorder %s15, 3
      %p114 = pnand %p112, %p113
      %p115 = pneg %p114
      // Predicated region
      $region9: #{tpu_custom_call.1} parent=5 // pred_check
        _
      $region10: #{tpu_custom_call.1} parent=5 // pred_check_branch
        %117 = sbr.rel (%p114) target = $region12
      $region11: #{tpu_custom_call.1} parent=5 // pred_region
        %s118 = ssub.s32 %s15, 1
        // Predicated region
        $region13: #{tpu_custom_call.1} parent=11 // pred_check
          %p119 = pneg %p76
        $region14: #{tpu_custom_call.1} parent=11 // pred_check_branch
          %121 = sbr.rel (%p119) target = $region16
        $region15: #{tpu_custom_call.1} parent=11 // pred_region
          %123 = vsyncadd [#allocation6], 0
          %s124 = sshll.u32 %s1, 4
          %s125 = int_to_ptr.hbm [resolvable:$true] %s124
          %s126 = sshll.u32 [#allocation5], 4
          %s127 = int_to_ptr.vmem [resolvable:$true] %s126
          %132 = dma.hbm_to_vmem [thread:$0]  %s125, 256, %s127, [#allocation6], 128, 128, 8
        $region16: #{tpu_custom_call.1} parent=11 // pred_fallthru
          _
      $region12: #{tpu_custom_call.1} parent=5 // pred_fallthru
        _
      %p133 = scmp.lt.s32.totalorder %s15, 2
      // Predicated region
      $region17: #{tpu_custom_call.1} parent=5 // pred_check
        %p134 = pneg %p133
      $region18: #{tpu_custom_call.1} parent=5 // pred_check_branch
        %136 = sbr.rel (%p134) target = $region20
      $region19: #{tpu_custom_call.1} parent=5 // pred_region
        // Predicated region
        $region21: #{tpu_custom_call.1} parent=19 // pred_check
          %p137 = pneg %p49
        $region22: #{tpu_custom_call.1} parent=19 // pred_check_branch
          %139 = sbr.rel (%p137) target = $region24
        $region23: #{tpu_custom_call.1} parent=19 // pred_region
          %s140 = sand.u32 %s39, 1
          %s141 = scalar_lea.sflag [#allocation3], %s140
          %s142 = sand.u32 %s39, 1
          %s143 = smul.addr %s142, 64
          %s144 = scalar_lea.vmem [#allocation2], %s143
          %s145 = smul.u32 4, %s23
          %147 = vsyncadd %s141, 0
          %s148 = smul.addr %s145, 2
          %s149 = smul.addr %s22, 8
          %s150 = sadd.s32 %s148, %s149
          %s151 = smul.addr %s150, 8
          %s152 = scalar_lea.hbm %s0, %s151
          %s153 = sshll.u32 %s152, 4
          %s154 = int_to_ptr.hbm [resolvable:$true] %s153
          %s155 = sshll.u32 %s144, 4
          %s156 = int_to_ptr.vmem [resolvable:$true] %s155
          %161 = dma.hbm_to_vmem [thread:$0]  %s154, 1024, %s156, %s141, 128, 128, 8
        $region24: #{tpu_custom_call.1} parent=19 // pred_fallthru
          _
      $region20: #{tpu_custom_call.1} parent=5 // pred_fallthru
        _
      %p162 = scmp.le.s32.totalorder 1, %s15
      %p163 = scmp.lt.s32.totalorder %s15, 3
      %p164 = pnand %p162, %p163
      %p165 = pneg %p164
      // Predicated region
      $region25: #{tpu_custom_call.1} parent=5 // pred_check
        _
      $region26: #{tpu_custom_call.1} parent=5 // pred_check_branch
        %167 = sbr.rel (%p164) target = $region28
      $region27: #{tpu_custom_call.1} parent=5 // pred_region
        %s168 = ssub.s32 %s15, 1
        %s169 = sand.u32 %s42, 1
        %s170 = scalar_lea.sflag [#allocation3], %s169
        %s171 = sand.u32 %s42, 1
        %s172 = smul.addr %s171, 64
        %s173 = scalar_lea.vmem [#allocation2], %s172
        // Predicated region
        $region29: #{tpu_custom_call.1} parent=27 // pred_check
          %p174 = pneg %p55
        $region30: #{tpu_custom_call.1} parent=27 // pred_check_branch
          %176 = sbr.rel (%p174) target = $region32
        $region31: #{tpu_custom_call.1} parent=27 // pred_region
          %178 = dma.done %s170, 1024
        $region32: #{tpu_custom_call.1} parent=27 // pred_fallthru
          _
        // Predicated region
        $region33: #{tpu_custom_call.1} parent=27 // pred_check
          %p179 = pneg %p76
        $region34: #{tpu_custom_call.1} parent=27 // pred_check_branch
          %181 = sbr.rel (%p179) target = $region36
        $region35: #{tpu_custom_call.1} parent=27 // pred_region
          %183 = dma.done [#allocation6], 256
        $region36: #{tpu_custom_call.1} parent=27 // pred_fallthru
          _
        %s184 = sand.u32 %s42, 1
        %s185 = scalar_lea.sflag [#allocation3], %s184
        %s186 = sand.u32 %s42, 1
        %s187 = smul.addr %s186, 64
        %s188 = scalar_lea.vmem [#allocation2], %s187
        %p189 = pneg %p55
        %p190 = pneg %p52
        %p191 = pneg %p76
        %p192 = pneg %p73
        %p193 = pneg %p104
        %p194 = pneg %p101
        %s195 = sand.u32 %s91, 1
        %s196 = scalar_lea.sflag [#allocation4], %s195
        %s197 = sand.u32 %s91, 1
        %s198 = smul.addr %s197, 64
        %s199 = scalar_lea.vmem [#allocation7], %s198
        %s200 = smul.u32 4, %s25
        %s201 = smul.u32 4, %s25
        %v202 = vld [vmem:[%s173] sm:$0xff]
        %v203 = vld [vmem:[%s173 + $0x8] sm:$0xff]
        %v204 = vld [vmem:[%s173 + $0x10] sm:$0xff]
        %v205 = vld [vmem:[%s173 + $0x18] sm:$0xff]
        %v206 = vld [vmem:[%s173 + $0x20] sm:$0xff]
        %v207 = vld [vmem:[%s173 + $0x28] sm:$0xff]
        %v208 = vld [vmem:[%s173 + $0x30] sm:$0xff]
        %v209 = vld [vmem:[%s173 + $0x38] sm:$0xff]
        %v210 = vld [vmem:[#allocation5] sm:$0xff]
        %v211 = vld [vmem:[#allocation5 + $0x8] sm:$0xff]
        %vm212 = vcmask 130048
        %v214 = vsel %vm212, %v202, 0
        %v217 = vsel %vm212, %v203, 0
        %v220 = vsel %vm212, %v204, 0
        %v223 = vsel %vm212, %v205, 0
        %v226 = vsel %vm212, %v206, 0
        %v229 = vsel %vm212, %v207, 0
        %v232 = vsel %vm212, %v208, 0
        %v235 = vsel %vm212, %v209, 0
        %237 = vmatpush.msra.mxu0 0.0
        %238 = vmatpush.msra.mxu0 0.0
        %239 = vmatpush.msra.mxu0 0.0
        %240 = vmatpush.msra.mxu0 0.0
        %241 = vmatpush.msra.mxu0 0.0
        %242 = vmatpush.msra.mxu0 0.0
        %243 = vmatpush.msra.mxu0 0.0
        %244 = vmatpush.msra.mxu0 0.0
        %245 = vmatpush.msra.mxu0 0.0
        %246 = vmatpush.msra.mxu0 0.0
        %247 = vmatpush.msra.mxu0 0.0
        %248 = vmatpush.msra.mxu0 0.0
        %249 = vmatpush.msra.mxu0 0.0
        %250 = vmatpush.msra.mxu0 0.0
        %251 = vmatpush.msra.mxu0 %v211
        %252 = vmatpush.msra.mxu0 %v210
        %253 = vmatmul.f32.gmra.mxu0 %v214
        %v254 = vpop.f32.mrf.mxu0
        %v255 = vadd.f32 0.0, %v254
        %256 = vmatmul.f32.gmra.mxu0 %v217
        %v257 = vpop.f32.mrf.mxu0
        %v258 = vadd.f32 0.0, %v257
        %259 = vmatmul.f32.gmra.mxu0 %v220
        %v260 = vpop.f32.mrf.mxu0
        %v261 = vadd.f32 0.0, %v260
        %262 = vmatmul.f32.gmra.mxu0 %v223
        %v263 = vpop.f32.mrf.mxu0
        %v264 = vadd.f32 0.0, %v263
        %265 = vmatmul.f32.gmra.mxu0 %v226
        %v266 = vpop.f32.mrf.mxu0
        %v267 = vadd.f32 0.0, %v266
        %268 = vmatmul.f32.gmra.mxu0 %v229
        %v269 = vpop.f32.mrf.mxu0
        %v270 = vadd.f32 0.0, %v269
        %271 = vmatmul.f32.gmra.mxu0 %v232
        %v272 = vpop.f32.mrf.mxu0
        %v273 = vadd.f32 0.0, %v272
        %274 = vmatmul.f32.gmra.mxu0 %v235
        %v275 = vpop.f32.mrf.mxu0
        %v276 = vadd.f32 0.0, %v275
        %277 = vdwg.mxu0
        %vm278 = vcmask 523264
        %279 = vst.msk [vmem:[%s199] sm:$0xff] %vm278, %v255
        %280 = vst.msk [vmem:[%s199 + $0x8] sm:$0xff] %vm278, %v258
        %281 = vst.msk [vmem:[%s199 + $0x10] sm:$0xff] %vm278, %v261
        %282 = vst.msk [vmem:[%s199 + $0x18] sm:$0xff] %vm278, %v264
        %283 = vst.msk [vmem:[%s199 + $0x20] sm:$0xff] %vm278, %v267
        %284 = vst.msk [vmem:[%s199 + $0x28] sm:$0xff] %vm278, %v270
        %285 = vst.msk [vmem:[%s199 + $0x30] sm:$0xff] %vm278, %v273
        %286 = vst.msk [vmem:[%s199 + $0x38] sm:$0xff] %vm278, %v276
        %s287 = sand.u32 %s91, 1
        %s288 = scalar_lea.sflag [#allocation4], %s287
        %s289 = sand.u32 %s91, 1
        %s290 = smul.addr %s289, 64
        %s291 = scalar_lea.vmem [#allocation7], %s290
        // Predicated region
        $region37: #{tpu_custom_call.1} parent=27 // pred_check
          %p292 = pneg %p101
        $region38: #{tpu_custom_call.1} parent=27 // pred_check_branch
          %294 = sbr.rel (%p292) target = $region40
        $region39: #{tpu_custom_call.1} parent=27 // pred_region
          %s295 = smul.u32 4, %s25
          %297 = vsyncadd %s288, 0
          %s298 = smul.addr %s295, 2
          %s299 = smul.addr %s24, 8
          %s300 = sadd.s32 %s298, %s299
          %s301 = smul.addr %s300, 8
          %s302 = scalar_lea.hbm %s2, %s301
          %s303 = sshll.u32 %s291, 4
          %s304 = int_to_ptr.vmem [resolvable:$true] %s303
          %s305 = sshll.u32 %s302, 4
          %s306 = int_to_ptr.hbm [resolvable:$true] %s305
          %311 = dma.vmem_to_hbm [thread:$0]  %s304, 1024, %s306, %s288, 128, 128, 8
        $region40: #{tpu_custom_call.1} parent=27 // pred_fallthru
          _
      $region28: #{tpu_custom_call.1} parent=5 // pred_fallthru
        _
      %p312 = scmp.le.s32.totalorder 2, %s15
      // Predicated region
      $region41: #{tpu_custom_call.1} parent=5 // pred_check
        %p313 = pneg %p312
      $region42: #{tpu_custom_call.1} parent=5 // pred_check_branch
        %315 = sbr.rel (%p313) target = $region44
      $region43: #{tpu_custom_call.1} parent=5 // pred_region
        %s316 = ssub.s32 %s15, 2
        // Predicated region
        $region45: #{tpu_custom_call.1} parent=43 // pred_check
          %p317 = pneg %p107
        $region46: #{tpu_custom_call.1} parent=43 // pred_check_branch
          %319 = sbr.rel (%p317) target = $region48
        $region47: #{tpu_custom_call.1} parent=43 // pred_region
          %s320 = sand.u32 %s92, 1
          %s321 = scalar_lea.sflag [#allocation4], %s320
          %s322 = sand.u32 %s92, 1
          %s323 = smul.addr %s322, 64
          %s324 = scalar_lea.vmem [#allocation7], %s323
          %326 = dma.done %s321, 1024
        $region48: #{tpu_custom_call.1} parent=43 // pred_fallthru
          _
      $region44: #{tpu_custom_call.1} parent=5 // pred_fallthru
        _
    $region6: #{tpu_custom_call.1} parent=1 // loop_footer
      %s19 = sadd.s32 1, %s15
    $region7: #{tpu_custom_call.1} parent=1 // loop_footer_branch
      %14 = sbr.rel target = $region3
    $region8: #{tpu_custom_call.1} parent=1 // loop_exit
      _
    %327 = vsyncpa [#allocation3], 1
    %s328 = scalar_lea.sflag [#allocation3], 1
    %329 = vsyncpa %s328, 1
    %330 = vsyncpa [#allocation6], 1
    %331 = vsyncpa [#allocation4], 1
    %s332 = scalar_lea.sflag [#allocation4], 1
    %333 = vsyncpa %s332, 1

</llo_original>
